<compile_context>
chip_gen: v5e
topology: v5e:2x2
jax: 0.10.0
libtpu: 0.0.40
codegen_flags: <defaults>
</compile_context>

<pallas_src>
from typing import NamedTuple

import jax
import jax.numpy as jnp
from jax.experimental import pallas as pl
from jax.experimental.pallas import tpu as pltpu


def _round_up(v, m):
    return (v + m - 1) // m * m


def _vmem_cap_bytes():
    """Physical VMEM of the current generation (conservative fallback: 64 MiB)."""
    try:
        info = pltpu.get_tpu_info()
        cap = getattr(info, "vmem_capacity_bytes", None)
        if cap:
            return int(cap)
    except Exception:
        pass
    return 64 << 20  # v7x per-TensorCore VMEM; safe lower bound for v5e/v6e too


class MLPParams(NamedTuple):
    w1: jax.Array   # [D_in_p, H_p]   bf16, zero-padded
    b1: jax.Array   # [1, H_p]        f32
    w2: jax.Array   # [H_p, D_out_p]  bf16, zero-padded
    b2: jax.Array   # [1, D_out_p]    f32
    d_in: int
    d_out: int


def prepare_mlp_params(w1, b1, w2, b2) -> MLPParams:
    """One-time setup: lane-pad feature dims to 128 and cast weights to bf16.

    Weights are stored pre-transposed ([in, out]) relative to nn.Linear.
    Padded rows/cols are zero so they contribute nothing to the matmuls.
    """
    d_in, h = w1.shape
    d_out = w2.shape[1]
    d_in_p, h_p, d_out_p = (_round_up(d_in, 128), _round_up(h, 128),
                            _round_up(d_out, 128))

    w1_p = jnp.zeros((d_in_p, h_p), jnp.bfloat16).at[:d_in, :h].set(
        w1.astype(jnp.bfloat16))
    b1_p = jnp.zeros((1, h_p), jnp.float32).at[0, :h].set(b1.astype(jnp.float32))
    w2_p = jnp.zeros((h_p, d_out_p), jnp.bfloat16).at[:h, :d_out].set(
        w2.astype(jnp.bfloat16))
    b2_p = jnp.zeros((1, d_out_p), jnp.float32).at[0, :d_out].set(
        b2.astype(jnp.float32))
    return MLPParams(w1_p, b1_p, w2_p, b2_p, d_in, d_out)


def mlp_kernel(x_ref, w1_ref, b1_ref, w2_ref, b2_ref, o_ref):
    # fc1: bf16 feed, f32 accumulate on the MXU.
    h = jnp.dot(x_ref[...], w1_ref[...], preferred_element_type=jnp.float32)
    # bias add + ReLU in f32 (VPU).
    h = jnp.maximum(h + b1_ref[...], 0.0)
    # TODO(synk): dropout is eval-mode identity here (no stochastic masking).
    # fc2: cast post-ReLU activation to bf16 for the MXU, accumulate in f32.
    o = jnp.dot(h.astype(jnp.bfloat16), w2_ref[...],
                preferred_element_type=jnp.float32)
    # Emit the final dtype directly from the kernel (no post-call astype pass).
    o_ref[...] = (o + b2_ref[...]).astype(o_ref.dtype)


def mlp_forward(x, params: MLPParams, *, tile_b=None):
    """x: [B, D_in]; params from prepare_mlp_params(). Returns [B, D_out] in x.dtype."""
    B, D_in = x.shape
    assert D_in == params.d_in, (D_in, params.d_in)
    D_in_p, H_p = params.w1.shape
    D_out_p = params.w2.shape[1]
    D_out = params.d_out
    out_dtype = x.dtype
    out_bytes = jnp.dtype(out_dtype).itemsize

    # --- Batch tile selection -------------------------------------------------
    if tile_b is None:
        if B >= 512:
            tile_b = 512           # ~85% of HBM roofline on v6e vs ~63% at 256
        elif B >= 256:
            tile_b = 256
        elif B >= 16:
            tile_b = _round_up(B, 16)   # bf16 packs 16 sublanes per vreg
        else:
            tile_b = _round_up(B, 8)

    # v7x megacore: prefer >=2 grid steps so both TensorCores get work
    # (no effect on single-TC v5e/v6e).
    while tile_b > 16 and -(-B // tile_b) < 2 and B > tile_b // 2:
        tile_b = _round_up(tile_b // 2, 8)

    # --- VMEM budget (generation-aware, never the whole physical VMEM) ---------
    cap = _vmem_cap_bytes()
    w_bytes = (params.w1.size * 2 + params.w2.size * 2
               + params.b1.size * 4 + params.b2.size * 4)

    def _need(tb):
        act = 2 * tb * D_in_p * 2 + 2 * tb * D_out_p * out_bytes  # double-buffered
        scratch = tb * H_p * 4                                    # f32 intermediate h
        return 2 * w_bytes + act + scratch

    while _need(tile_b) > int(cap * 0.7) and tile_b > 16:
        tile_b = _round_up(tile_b // 2, 8)
    vmem_limit = min(max(int(_need(tile_b) * 1.25) + (2 << 20), 32 << 20),
                     int(cap * 0.75))

    grid = (pl.cdiv(B, tile_b),)

    # --- Activation: cast to bf16; pad features only when required -------------
    x_bf = x.astype(jnp.bfloat16)
    if D_in_p != D_in:
        x_in = jnp.pad(x_bf, ((0, 0), (0, D_in_p - D_in)))
    else:
        x_in = x_bf

    flops = 2 * B * (D_in_p * H_p + H_p * D_out_p)
    bytes_accessed = (B * D_in_p * 2 + params.w1.size * 2 + params.w2.size * 2
                      + params.b1.size * 4 + params.b2.size * 4
                      + B * D_out_p * out_bytes)

    out = pl.pallas_call(
        mlp_kernel,
        out_shape=jax.ShapeDtypeStruct((B, D_out_p), out_dtype),
        grid_spec=pltpu.PrefetchScalarGridSpec(
            num_scalar_prefetch=0,
            grid=grid,
            in_specs=[
                # Activation tile marches over the batch axis.
                pl.BlockSpec((tile_b, D_in_p), lambda i: (i, 0)),
                # Weights / biases: constant block index -> VMEM-resident.
                pl.BlockSpec((D_in_p, H_p), lambda i: (0, 0)),
                pl.BlockSpec((1, H_p), lambda i: (0, 0)),
                pl.BlockSpec((H_p, D_out_p), lambda i: (0, 0)),
                pl.BlockSpec((1, D_out_p), lambda i: (0, 0)),
            ],
            out_specs=pl.BlockSpec((tile_b, D_out_p), lambda i: (i, 0)),
        ),
        compiler_params=pltpu.CompilerParams(
            dimension_semantics=("parallel",),   # megacore shard on v7x
            vmem_limit_bytes=vmem_limit,
        ),
        cost_estimate=pl.CostEstimate(
            flops=flops, transcendentals=0, bytes_accessed=bytes_accessed),
    )(x_in, params.w1, params.b1, params.w2, params.b2)

    # Only a column slice remains (and only when D_out is not 128-aligned).
    return out if D_out_p == D_out else out[:, :D_out]


if __name__ == "__main__":
    # Shapes consistent with the module: input_dim=32, hidden_dim=128, output_dim=16.
    B, D_in, H, D_out = 8, 32, 128, 16

    key = jax.random.PRNGKey(0)
    kx, kw1, kb1, kw2, kb2 = jax.random.split(key, 5)

    x = jax.random.normal(kx, (B, D_in), dtype=jnp.float32)

    # PyTorch Linear-style uniform init; weights stored [in, out].
    bound1 = 1.0 / jnp.sqrt(D_in)
    w1 = jax.random.uniform(kw1, (D_in, H), jnp.float32, -bound1, bound1)
    b1 = jax.random.uniform(kb1, (H,), jnp.float32, -bound1, bound1)

    bound2 = 1.0 / jnp.sqrt(H)
    w2 = jax.random.uniform(kw2, (H, D_out), jnp.float32, -bound2, bound2)
    b2 = jax.random.uniform(kb2, (D_out,), jnp.float32, -bound2, bound2)

    # One-time setup (pad + bf16 cast), then the per-call path is lean.
    params = prepare_mlp_params(w1, b1, w2, b2)

    out = mlp_forward(x, params)
    out = jax.block_until_ready(out)
    assert out.shape == (B, D_out), out.shape
    assert out.dtype == x.dtype, out.dtype

    # Reference with the same bf16 input rounding + f32 accumulation.
    xb = x.astype(jnp.bfloat16).astype(jnp.float32)
    w1b = w1.astype(jnp.bfloat16).astype(jnp.float32)
    w2b = w2.astype(jnp.bfloat16).astype(jnp.float32)
    h_ref = jnp.maximum(xb @ w1b + b1, 0.0)
    ref = h_ref.astype(jnp.bfloat16).astype(jnp.float32) @ w2b + b2
    assert jnp.allclose(out.astype(jnp.float32), ref, atol=2e-2, rtol=2e-2), (
        float(jnp.max(jnp.abs(out.astype(jnp.float32) - ref))))

    print("KERNEL_OK")
</pallas_src>

<mosaic_0001>
module attributes {stable_mosaic.version = 11 : i64} {
  func.func @mlp_kernel(%arg0: i32, %arg1: memref<8x128xbf16, #tpu.memory_space<vmem>>, %arg2: memref<128x128xbf16, #tpu.memory_space<vmem>>, %arg3: memref<1x128xf32, #tpu.memory_space<vmem>>, %arg4: memref<128x128xbf16, #tpu.memory_space<vmem>>, %arg5: memref<1x128xf32, #tpu.memory_space<vmem>>, %arg6: memref<8x128xf32, #tpu.memory_space<vmem>>) attributes {dimension_semantics = [#tpu.dimension_semantics<parallel>], iteration_bounds = array<i64: 1>, scalar_prefetch = 0 : i64, scratch_operands = 0 : i64, tpu.core_type = #tpu.core_type<tc>, window_params = [{transform_indices = @transform_0, window_bounds = array<i64: 8, 128>}, {pipeline_mode = #tpu.pipeline_mode<synchronous>, transform_indices = @transform_1, window_bounds = array<i64: 128, 128>}, {pipeline_mode = #tpu.pipeline_mode<synchronous>, transform_indices = @transform_2, window_bounds = array<i64: 1, 128>}, {pipeline_mode = #tpu.pipeline_mode<synchronous>, transform_indices = @transform_3, window_bounds = array<i64: 128, 128>}, {pipeline_mode = #tpu.pipeline_mode<synchronous>, transform_indices = @transform_4, window_bounds = array<i64: 1, 128>}, {transform_indices = @transform_5, window_bounds = array<i64: 8, 128>}]} {
    %c0 = arith.constant 0 : index
    %c0_0 = arith.constant 0 : index
    %0 = vector.load %arg1[%c0, %c0_0] : memref<8x128xbf16, #tpu.memory_space<vmem>>, vector<8x128xbf16>
    %c0_1 = arith.constant 0 : index
    %c0_2 = arith.constant 0 : index
    %1 = vector.load %arg2[%c0_1, %c0_2] : memref<128x128xbf16, #tpu.memory_space<vmem>>, vector<128x128xbf16>
    %cst = arith.constant dense<0.000000e+00> : vector<8x128xf32>
    %2 = tpu.matmul %0, %1, %cst {dimension_numbers = #tpu.dot_dimension_numbers<[1], [0], [0], [1], [0, 0, 1, 1], [], []>} : vector<8x128xbf16>, vector<128x128xbf16>, vector<8x128xf32> -> vector<8x128xf32>
    %c0_3 = arith.constant 0 : index
    %c0_4 = arith.constant 0 : index
    %3 = vector.load %arg3[%c0_3, %c0_4] : memref<1x128xf32, #tpu.memory_space<vmem>>, vector<1x128xf32>
    %4 = vector.broadcast %3 : vector<1x128xf32> to vector<8x128xf32>
    %5 = arith.addf %2, %4 : vector<8x128xf32>
    %cst_5 = arith.constant 0.000000e+00 : f32
    %6 = vector.broadcast %cst_5 : f32 to vector<8x128xf32>
    %7 = arith.maximumf %5, %6 : vector<8x128xf32>
    %8 = arith.truncf %7 : vector<8x128xf32> to vector<8x128xbf16>
    %c0_6 = arith.constant 0 : index
    %c0_7 = arith.constant 0 : index
    %9 = vector.load %arg4[%c0_6, %c0_7] : memref<128x128xbf16, #tpu.memory_space<vmem>>, vector<128x128xbf16>
    %cst_8 = arith.constant dense<0.000000e+00> : vector<8x128xf32>
    %10 = tpu.matmul %8, %9, %cst_8 {dimension_numbers = #tpu.dot_dimension_numbers<[1], [0], [0], [1], [0, 0, 1, 1], [], []>} : vector<8x128xbf16>, vector<128x128xbf16>, vector<8x128xf32> -> vector<8x128xf32>
    %c0_9 = arith.constant 0 : index
    %c0_10 = arith.constant 0 : index
    %11 = vector.load %arg5[%c0_9, %c0_10] : memref<1x128xf32, #tpu.memory_space<vmem>>, vector<1x128xf32>
    %12 = vector.broadcast %11 : vector<1x128xf32> to vector<8x128xf32>
    %13 = arith.addf %10, %12 : vector<8x128xf32>
    %c0_11 = arith.constant 0 : index
    %c0_12 = arith.constant 0 : index
    %14 = vector.load %arg6[%c0_11, %c0_12] : memref<8x128xf32, #tpu.memory_space<vmem>>, vector<8x128xf32>
    tpu.vector_store %arg6[%c0_11, %c0_12], %13 {strides = array<i32>} : memref<8x128xf32, #tpu.memory_space<vmem>>, vector<8x128xf32>,
    return
  }
  func.func @transform_0(%arg0: i32) -> (i32, i32) {
    %c0_i32 = arith.constant 0 : i32
    %c0_i32_0 = arith.constant 0 : i32
    return %arg0, %c0_i32 : i32, i32
  }
  func.func @transform_1(%arg0: i32) -> (i32, i32) {
    %c0_i32 = arith.constant 0 : i32
    %c0_i32_0 = arith.constant 0 : i32
    %c0_i32_1 = arith.constant 0 : i32
    return %c0_i32, %c0_i32_0 : i32, i32
  }
  func.func @transform_2(%arg0: i32) -> (i32, i32) {
    %c0_i32 = arith.constant 0 : i32
    %c0_i32_0 = arith.constant 0 : i32
    %c0_i32_1 = arith.constant 0 : i32
    return %c0_i32, %c0_i32_0 : i32, i32
  }
  func.func @transform_3(%arg0: i32) -> (i32, i32) {
    %c0_i32 = arith.constant 0 : i32
    %c0_i32_0 = arith.constant 0 : i32
    %c0_i32_1 = arith.constant 0 : i32
    return %c0_i32, %c0_i32_0 : i32, i32
  }
  func.func @transform_4(%arg0: i32) -> (i32, i32) {
    %c0_i32 = arith.constant 0 : i32
    %c0_i32_0 = arith.constant 0 : i32
    %c0_i32_1 = arith.constant 0 : i32
    return %c0_i32, %c0_i32_0 : i32, i32
  }
  func.func @transform_5(%arg0: i32) -> (i32, i32) {
    %c0_i32 = arith.constant 0 : i32
    %c0_i32_0 = arith.constant 0 : i32
    return %arg0, %c0_i32 : i32, i32
  }
}

</mosaic_0001>

<llo_original>
// kernel: tpu_custom_call.1
$region0: #{tpu_custom_call.1}
  #allocation0 [shape = 'u32[]', space=smem, size = 0x4, offset = 0x4, fixed_abs, tag = 'smem constant byte address 0x4 - core index']
  #allocation1 [shape = 'u32[72,128]{1,0:T(1,128)}', space=vmem, size = 0x9000, scoped, tag = 'internal scratch']
  %s0 = inlined_call_operand.hbm [shape: bf16[8,128], index: 0, kind: input, shape index: {}]
  %s1 = inlined_call_operand.hbm [shape: bf16[128,128], index: 1, kind: input, shape index: {}]
  %s2 = inlined_call_operand.vmem [shape: f32[1,128], index: 2, kind: input, shape index: {}]
  %s3 = inlined_call_operand.hbm [shape: bf16[128,128], index: 3, kind: input, shape index: {}]
  %s4 = inlined_call_operand.vmem [shape: f32[1,128], index: 4, kind: input, shape index: {}]
  %s5 = inlined_call_operand.hbm [shape: f32[8,128], index: 5, kind: output, shape index: {}]
  %s6 = sld [smem:[#allocation0]]
  $region42: #{tpu_custom_call.1} parent=0
    _
  %s8 = ssub.s32 1, %s6
  %s9 = scalar_select 0, %s8, %s6
  $region1: #{tpu_custom_call.1} parent=0
    #allocation2 [shape = 'u8[2048]{0}', space=vmem, size = 0x800, scoped, tag = 'input window, operand 0, single buffered']
    #allocation3 [shape = 's32[1]{0}', space=sflag, size = 0x4, scoped, tag = 'scoped memory for tpu_custom_call.1']
    #allocation4 [shape = 's32[1]{0}', space=sflag, size = 0x4, scoped, tag = 'scoped memory for tpu_custom_call.1']
    #allocation5 [shape = 'u8[32768]{0}', space=vmem, size = 0x8000, scoped, tag = 'input window, operand 1, single buffered']
    #allocation6 [shape = 's32[1]{0}', space=sflag, size = 0x4, scoped, tag = 'scoped memory for tpu_custom_call.1']
    #allocation7 [shape = 'u8[32768]{0}', space=vmem, size = 0x8000, scoped, tag = 'input window, operand 3, single buffered']
    #allocation8 [shape = 'u8[4096]{0}', space=vmem, size = 0x1000, scoped, tag = 'output window, operand 0, single buffered']
    %10 = vsyncpa [#allocation3], 0
    %11 = vsyncpa [#allocation6], 0
    %12 = vsyncpa [#allocation4], 0
    // Predicated region
    $region2: #{tpu_custom_call.1} parent=1 // pred_check
      _
    $region3: #{tpu_custom_call.1} parent=1 // pred_check_branch
      %14 = sbr.rel (0) target = $region5
    $region4: #{tpu_custom_call.1} parent=1 // pred_region
      %16 = vsyncadd [#allocation3], 0
      %s18 = sshll.u32 %s0, 4
      %s19 = int_to_ptr.hbm [resolvable:$true] %s18
      %s20 = sshll.u32 [#allocation2], 4
      %s21 = int_to_ptr.vmem [resolvable:$true] %s20
      %23 = dma.hbm_to_vmem [thread:$0]  %s19, 64, %s21, [#allocation3]
    $region5: #{tpu_custom_call.1} parent=1 // pred_fallthru
      _
    // Predicated region
    $region6: #{tpu_custom_call.1} parent=1 // pred_check
      _
    $region7: #{tpu_custom_call.1} parent=1 // pred_check_branch
      %25 = sbr.rel (0) target = $region9
    $region8: #{tpu_custom_call.1} parent=1 // pred_region
      %27 = vsyncadd [#allocation6], 0
      %s28 = sshll.u32 %s1, 4
      %s29 = int_to_ptr.hbm [resolvable:$true] %s28
      %s30 = sshll.u32 [#allocation5], 4
      %s31 = int_to_ptr.vmem [resolvable:$true] %s30
      %36 = dma.hbm_to_vmem [thread:$0]  %s29, 1024, %s31, [#allocation6], 64, 64, 4
    $region9: #{tpu_custom_call.1} parent=1 // pred_fallthru
      _
    // Predicated region
    $region10: #{tpu_custom_call.1} parent=1 // pred_check
      _
    $region11: #{tpu_custom_call.1} parent=1 // pred_check_branch
      %38 = sbr.rel (0) target = $region13
    $region12: #{tpu_custom_call.1} parent=1 // pred_region
      _
    $region13: #{tpu_custom_call.1} parent=1 // pred_fallthru
      _
    // Predicated region
    $region14: #{tpu_custom_call.1} parent=1 // pred_check
      _
    $region15: #{tpu_custom_call.1} parent=1 // pred_check_branch
      %40 = sbr.rel (0) target = $region17
    $region16: #{tpu_custom_call.1} parent=1 // pred_region
      %42 = vsyncadd [#allocation6], 0
      %s43 = sshll.u32 %s3, 4
      %s44 = int_to_ptr.hbm [resolvable:$true] %s43
      %s45 = sshll.u32 [#allocation7], 4
      %s46 = int_to_ptr.vmem [resolvable:$true] %s45
      %51 = dma.hbm_to_vmem [thread:$0]  %s44, 1024, %s46, [#allocation6], 64, 64, 4
    $region17: #{tpu_custom_call.1} parent=1 // pred_fallthru
      _
    // Predicated region
    $region18: #{tpu_custom_call.1} parent=1 // pred_check
      _
    $region19: #{tpu_custom_call.1} parent=1 // pred_check_branch
      %53 = sbr.rel (0) target = $region21
    $region20: #{tpu_custom_call.1} parent=1 // pred_region
      _
    $region21: #{tpu_custom_call.1} parent=1 // pred_fallthru
      _
    // Predicated region
    $region22: #{tpu_custom_call.1} parent=1 // pred_check
      _
    $region23: #{tpu_custom_call.1} parent=1 // pred_check_branch
      %55 = sbr.rel (0) target = $region25
    $region24: #{tpu_custom_call.1} parent=1 // pred_region
      %57 = dma.done [#allocation3], 64
    $region25: #{tpu_custom_call.1} parent=1 // pred_fallthru
      _
    // Predicated region
    $region26: #{tpu_custom_call.1} parent=1 // pred_check
      _
    $region27: #{tpu_custom_call.1} parent=1 // pred_check_branch
      %59 = sbr.rel (0) target = $region29
    $region28: #{tpu_custom_call.1} parent=1 // pred_region
      %61 = dma.done [#allocation6], 1024
    $region29: #{tpu_custom_call.1} parent=1 // pred_fallthru
      _
    // Predicated region
    $region30: #{tpu_custom_call.1} parent=1 // pred_check
      _
    $region31: #{tpu_custom_call.1} parent=1 // pred_check_branch
      %63 = sbr.rel (0) target = $region33
    $region32: #{tpu_custom_call.1} parent=1 // pred_region
      %65 = dma.done [#allocation6], 1024
    $region33: #{tpu_custom_call.1} parent=1 // pred_fallthru
      _
    %v66 = vld [vmem:[#allocation2] sm:$0xf]
    %v67 = vld [vmem:[#allocation5] sm:$0xf]
    %v68 = vld [vmem:[#allocation5 + $0x4] sm:$0xf]
    %v69 = vld [vmem:[#allocation5 + $0x8] sm:$0xf]
    %v70 = vld [vmem:[#allocation5 + $0xc] sm:$0xf]
    %v71 = vld [vmem:[#allocation5 + $0x10] sm:$0xf]
    %v72 = vld [vmem:[#allocation5 + $0x14] sm:$0xf]
    %v73 = vld [vmem:[#allocation5 + $0x18] sm:$0xf]
    %v74 = vld [vmem:[#allocation5 + $0x1c] sm:$0xf]
    %v75 = vld [vmem:[#allocation5 + $0x20] sm:$0xf]
    %v76 = vld [vmem:[#allocation5 + $0x24] sm:$0xf]
    %v77 = vld [vmem:[#allocation5 + $0x28] sm:$0xf]
    %v78 = vld [vmem:[#allocation5 + $0x2c] sm:$0xf]
    %v79 = vld [vmem:[#allocation5 + $0x30] sm:$0xf]
    %v80 = vld [vmem:[#allocation5 + $0x34] sm:$0xf]
    %v81 = vld [vmem:[#allocation5 + $0x38] sm:$0xf]
    %v82 = vld [vmem:[#allocation5 + $0x3c] sm:$0xf]
    %v83 = vld [vmem:[%s2] sm:$0x1]
    %v85 = vperm.slane %v83, 0
    %v103 = vunpack.c.l.b16 %v67
    %v104 = vunpack.c.l.b16 %v68
    %v105 = vunpack.c.l.b16 %v69
    %v106 = vunpack.c.l.b16 %v70
    %v107 = vunpack.c.l.b16 %v71
    %v108 = vunpack.c.l.b16 %v72
    %v109 = vunpack.c.l.b16 %v73
    %v110 = vunpack.c.l.b16 %v74
    %v111 = vunpack.c.l.b16 %v75
    %v112 = vunpack.c.l.b16 %v76
    %v113 = vunpack.c.l.b16 %v77
    %v114 = vunpack.c.l.b16 %v78
    %v115 = vunpack.c.l.b16 %v79
    %v116 = vunpack.c.l.b16 %v80
    %v117 = vunpack.c.l.b16 %v81
    %v118 = vunpack.c.l.b16 %v82
    %v119 = vpack.c.b16 %v104, %v103
    %v120 = vpack.c.b16 %v106, %v105
    %v121 = vpack.c.b16 %v108, %v107
    %v122 = vpack.c.b16 %v110, %v109
    %v123 = vpack.c.b16 %v112, %v111
    %v124 = vpack.c.b16 %v114, %v113
    %v125 = vpack.c.b16 %v116, %v115
    %v126 = vpack.c.b16 %v118, %v117
    %135 = vmatpush.bf16.msra.mxu0 %v126
    %136 = vmatpush.bf16.msra.mxu0 %v125
    %137 = vmatpush.bf16.msra.mxu0 %v124
    %138 = vmatpush.bf16.msra.mxu0 %v123
    %139 = vmatpush.bf16.msra.mxu0 %v122
    %140 = vmatpush.bf16.msra.mxu0 %v121
    %141 = vmatpush.bf16.msra.mxu0 %v120
    %142 = vmatpush.bf16.msra.mxu0 %v119
    %143 = vmatmul.bf16.gmra.mxu0 %v66
    %v144 = vpop.f32.mrf.mxu0
    %v145 = vadd.f32 %v85, %v144
    %v146 = vpop.f32.mrf.mxu0
    %147 = vdwg.mxu0
    %v148 = vmax.f32 %v145, 0.0
    %v149 = vpack.c.bf16 %v148, %v148
    %v150 = vld [vmem:[#allocation7] sm:$0xf]
    %v151 = vld [vmem:[#allocation7 + $0x4] sm:$0xf]
    %v152 = vld [vmem:[#allocation7 + $0x8] sm:$0xf]
    %v153 = vld [vmem:[#allocation7 + $0xc] sm:$0xf]
    %v154 = vld [vmem:[#allocation7 + $0x10] sm:$0xf]
    %v155 = vld [vmem:[#allocation7 + $0x14] sm:$0xf]
    %v156 = vld [vmem:[#allocation7 + $0x18] sm:$0xf]
    %v157 = vld [vmem:[#allocation7 + $0x1c] sm:$0xf]
    %v158 = vld [vmem:[#allocation7 + $0x20] sm:$0xf]
    %v159 = vld [vmem:[#allocation7 + $0x24] sm:$0xf]
    %v160 = vld [vmem:[#allocation7 + $0x28] sm:$0xf]
    %v161 = vld [vmem:[#allocation7 + $0x2c] sm:$0xf]
    %v162 = vld [vmem:[#allocation7 + $0x30] sm:$0xf]
    %v163 = vld [vmem:[#allocation7 + $0x34] sm:$0xf]
    %v164 = vld [vmem:[#allocation7 + $0x38] sm:$0xf]
    %v165 = vld [vmem:[#allocation7 + $0x3c] sm:$0xf]
    %v166 = vld [vmem:[%s4] sm:$0x1]
    %v168 = vperm.slane %v166, 0
    %v186 = vunpack.c.l.b16 %v150
    %v187 = vunpack.c.l.b16 %v151
    %v188 = vunpack.c.l.b16 %v152
    %v189 = vunpack.c.l.b16 %v153
    %v190 = vunpack.c.l.b16 %v154
    %v191 = vunpack.c.l.b16 %v155
    %v192 = vunpack.c.l.b16 %v156
    %v193 = vunpack.c.l.b16 %v157
    %v194 = vunpack.c.l.b16 %v158
    %v195 = vunpack.c.l.b16 %v159
    %v196 = vunpack.c.l.b16 %v160
    %v197 = vunpack.c.l.b16 %v161
    %v198 = vunpack.c.l.b16 %v162
    %v199 = vunpack.c.l.b16 %v163
    %v200 = vunpack.c.l.b16 %v164
    %v201 = vunpack.c.l.b16 %v165
    %v202 = vpack.c.b16 %v187, %v186
    %v203 = vpack.c.b16 %v189, %v188
    %v204 = vpack.c.b16 %v191, %v190
    %v205 = vpack.c.b16 %v193, %v192
    %v206 = vpack.c.b16 %v195, %v194
    %v207 = vpack.c.b16 %v197, %v196
    %v208 = vpack.c.b16 %v199, %v198
    %v209 = vpack.c.b16 %v201, %v200
    %218 = vmatpush.bf16.msra.mxu0 %v209
    %219 = vmatpush.bf16.msra.mxu0 %v208
    %220 = vmatpush.bf16.msra.mxu0 %v207
    %221 = vmatpush.bf16.msra.mxu0 %v206
    %222 = vmatpush.bf16.msra.mxu0 %v205
    %223 = vmatpush.bf16.msra.mxu0 %v204
    %224 = vmatpush.bf16.msra.mxu0 %v203
    %225 = vmatpush.bf16.msra.mxu0 %v202
    %226 = vmatmul.bf16.gmra.mxu0 %v149
    %v227 = vpop.f32.mrf.mxu0
    %v228 = vadd.f32 %v168, %v227
    %v229 = vpop.f32.mrf.mxu0
    %230 = vdwg.mxu0
    %231 = vst [vmem:[#allocation8] sm:$0xff] %v228
    // Predicated region
    $region34: #{tpu_custom_call.1} parent=1 // pred_check
      _
    $region35: #{tpu_custom_call.1} parent=1 // pred_check_branch
      %233 = sbr.rel (0) target = $region37
    $region36: #{tpu_custom_call.1} parent=1 // pred_region
      %235 = vsyncadd [#allocation4], 0
      %s237 = sshll.u32 [#allocation8], 4
      %s238 = int_to_ptr.vmem [resolvable:$true] %s237
      %s239 = sshll.u32 %s5, 4
      %s240 = int_to_ptr.hbm [resolvable:$true] %s239
      %242 = dma.vmem_to_hbm [thread:$0]  %s238, 128, %s240, [#allocation4]
    $region37: #{tpu_custom_call.1} parent=1 // pred_fallthru
      _
    // Predicated region
    $region38: #{tpu_custom_call.1} parent=1 // pred_check
      _
    $region39: #{tpu_custom_call.1} parent=1 // pred_check_branch
      %244 = sbr.rel (0) target = $region41
    $region40: #{tpu_custom_call.1} parent=1 // pred_region
      %246 = dma.done [#allocation4], 128
    $region41: #{tpu_custom_call.1} parent=1 // pred_fallthru
      _
    %247 = vsyncpa [#allocation3], 1
    %248 = vsyncpa [#allocation6], 1
    %249 = vsyncpa [#allocation4], 1

</llo_original>
